<compile_context>
chip_gen: v7x
topology: tpu7x:2x2x1
jax: 0.10.0
libtpu: 0.0.40
codegen_flags: <defaults>
</compile_context>

<pallas_src>
import functools

import jax
import jax.numpy as jnp
from jax.experimental import pallas as pl
from jax.experimental.pallas import tpu as pltpu

M = 16      # input message size
NN_T = 64   # hidden width
OUT = 8     # transmitted symbols


def _forward_tile(x_ref, w1_ref, b1_ref, w2_ref, b2_ref, w3_ref, b3_ref):
    """fc1->relu->fc2->relu->fc3 for one (M, TB) tile. Returns (OUT, TB) f32."""
    x = x_ref[...]                                              # bf16 (M, TB)
    h1 = jnp.dot(w1_ref[...], x, preferred_element_type=jnp.float32)
    h1 = jnp.maximum(h1 + b1_ref[...], 0.0)                     # f32 (NN_T, TB)
    h2 = jnp.dot(w2_ref[...], h1.astype(jnp.bfloat16),
                 preferred_element_type=jnp.float32)
    h2 = jnp.maximum(h2 + b2_ref[...], 0.0)                     # f32 (NN_T, TB)
    y = jnp.dot(w3_ref[...], h2.astype(jnp.bfloat16),
                preferred_element_type=jnp.float32)
    return y + b3_ref[...]                                      # f32 (OUT, TB)


def _fwd_ssq_kernel(x_ref, w1_ref, b1_ref, w2_ref, b2_ref, w3_ref, b3_ref,
                    y_ref, ssq_ref, *, block_cols, total_cols):
    """Pass 1: write the yT tile and a scalar partial sum of squares."""
    y = _forward_tile(x_ref, w1_ref, b1_ref, w2_ref, b2_ref, w3_ref, b3_ref)
    y_ref[...] = y                                              # lane-dense vst
    col = (pl.program_id(0) * block_cols
           + jax.lax.broadcasted_iota(jnp.int32, (OUT, block_cols), 1))
    y2 = jnp.where(col < total_cols, y * y, 0.0)                # mask ragged tail
    ssq_ref[0] = jnp.sum(y2, keepdims=True)                     # (1, 1) scalar


def _scale_kernel(inv_ref, y_ref, out_ref):
    """Pass 2: pure VPU scale by the global normalization scalar (from SMEM)."""
    out_ref[...] = y_ref[...] * inv_ref[0]


def _round_up(a, b):
    return (a + b - 1) // b * b


def encoder_forward(x, params, *, block_rows=8192):
    """x: (B, M) float32 -> (B, OUT) float32 (power-normalized)."""
    B = x.shape[0]
    assert x.shape[1] == M

    if B > block_rows:
        assert block_rows % 128 == 0, "block_rows must be a multiple of 128"
        tb = block_rows
    elif B > 256:
        # Split into >=2 tiles so the "parallel" batch axis can shard across
        # both TensorCores on v7x (harmless on single-TC v5e/v6e).
        tb = _round_up(pl.cdiv(B, 2), 128)
    else:
        tb = B
    num_tiles = pl.cdiv(B, tb)

    # Lane-dense layouts: batch on the last (lane) axis.  The transpose fuses
    # with the bf16 cast into one cheap XLA op (x is only 64 B/row).
    xt = jnp.transpose(x).astype(jnp.bfloat16)                  # (M, B)
    w1 = params["w1"].astype(jnp.bfloat16)                      # (NN_T, M)
    w2 = params["w2"].astype(jnp.bfloat16)                      # (NN_T, NN_T)
    w3 = params["w3"].astype(jnp.bfloat16)                      # (OUT, NN_T)
    weight_args = (w1, params["b1"], w2, params["b2"], w3, params["b3"])

    x_spec = pl.BlockSpec((M, tb), lambda i: (0, i))
    y_spec = pl.BlockSpec((OUT, tb), lambda i: (0, i))
    # Constant index maps -> weights/biases DMA'd once, resident across grid.
    w_specs = [
        pl.BlockSpec((NN_T, M), lambda i: (0, 0)),
        pl.BlockSpec((NN_T, 1), lambda i: (0, 0)),
        pl.BlockSpec((NN_T, NN_T), lambda i: (0, 0)),
        pl.BlockSpec((NN_T, 1), lambda i: (0, 0)),
        pl.BlockSpec((OUT, NN_T), lambda i: (0, 0)),
        pl.BlockSpec((OUT, 1), lambda i: (0, 0)),
    ]
    cparams = pltpu.CompilerParams(dimension_semantics=("parallel",))

    flops_fwd = 2 * B * (M * NN_T + NN_T * NN_T + NN_T * OUT)
    w_bytes = 2 * (M * NN_T + NN_T * NN_T + NN_T * OUT) + 4 * (2 * NN_T + OUT)

    # ---- Pass 1: yT (lane-dense f32) + per-tile scalar sum of squares. ----
    y_t, partials = pl.pallas_call(
        functools.partial(_fwd_ssq_kernel, block_cols=tb, total_cols=B),
        grid=(num_tiles,),
        in_specs=[x_spec] + w_specs,
        out_specs=(y_spec, pl.BlockSpec((1, 1, 1), lambda i: (i, 0, 0))),
        out_shape=(jax.ShapeDtypeStruct((OUT, B), jnp.float32),
                   jax.ShapeDtypeStruct((num_tiles, 1, 1), jnp.float32)),
        compiler_params=cparams,
        cost_estimate=pl.CostEstimate(
            flops=flops_fwd, transcendentals=0,
            bytes_accessed=B * M * 2 + w_bytes + B * OUT * 4 + num_tiles * 4),
    )(xt, *weight_args)

    # Global scalar: 1 / sqrt(2 * mean(y^2)) over the real B*OUT elements.
    inv = jax.lax.rsqrt(2.0 * jnp.sum(partials) / (B * OUT))
    inv = jnp.reshape(inv, (1,)).astype(jnp.float32)

    # ---- Pass 2: pure VPU scale of the stored y (no MXU recompute). ----
    out_t = pl.pallas_call(
        _scale_kernel,
        grid=(num_tiles,),
        in_specs=[pl.BlockSpec(memory_space=pltpu.MemorySpace.SMEM), y_spec],
        out_specs=y_spec,
        out_shape=jax.ShapeDtypeStruct((OUT, B), jnp.float32),
        compiler_params=cparams,
        cost_estimate=pl.CostEstimate(
            flops=B * OUT, transcendentals=0,
            bytes_accessed=2 * B * OUT * 4 + 4),
    )(inv, y_t)

    return jnp.transpose(out_t)                                 # (B, OUT)


def init_params(key):
    """Deterministic synthetic parameters in PyTorch nn.Linear layout."""
    k1, k2, k3, k4, k5, k6 = jax.random.split(key, 6)

    def uniform(k, shape, fan_in):
        bound = 1.0 / jnp.sqrt(fan_in)
        return jax.random.uniform(k, shape, jnp.float32, -bound, bound)

    return {
        # weight: (out_features, in_features); bias stored as a column so the
        # lane-dense kernel can broadcast it across the batch lanes.
        "w1": uniform(k1, (NN_T, M), M),
        "b1": uniform(k2, (NN_T, 1), M),
        "w2": uniform(k3, (NN_T, NN_T), NN_T),
        "b2": uniform(k4, (NN_T, 1), NN_T),
        "w3": uniform(k5, (OUT, NN_T), NN_T),
        "b3": uniform(k6, (OUT, 1), NN_T),
    }


def reference_forward(x, p):
    """Pure-JAX reference using the same bf16 mixed-precision recipe."""
    bf16, f32 = jnp.bfloat16, jnp.float32
    xt = jnp.transpose(x).astype(bf16)
    w1 = p["w1"].astype(bf16)
    w2 = p["w2"].astype(bf16)
    w3 = p["w3"].astype(bf16)
    h1 = jnp.maximum(jnp.dot(w1, xt, preferred_element_type=f32) + p["b1"], 0.0)
    h2 = jnp.maximum(
        jnp.dot(w2, h1.astype(bf16), preferred_element_type=f32) + p["b2"], 0.0)
    y = jnp.dot(w3, h2.astype(bf16), preferred_element_type=f32) + p["b3"]
    y = y / jnp.sqrt(2.0 * jnp.mean(y * y))
    return jnp.transpose(y)


if __name__ == "__main__":
    key = jax.random.PRNGKey(0)
    kx, kx2, kp = jax.random.split(key, 3)
    params = init_params(kp)

    encode = jax.jit(encoder_forward, static_argnames=("block_rows",))

    # Small case (single tile).
    B = 8
    x = jax.random.normal(kx, (B, M), jnp.float32)
    out = encode(x, params)
    jax.block_until_ready(out)
    ref = reference_forward(x, params)
    assert out.shape == (B, OUT)
    assert jnp.allclose(out, ref, atol=1e-3, rtol=1e-3), (
        float(jnp.max(jnp.abs(out - ref))))

    # Multi-tile case with a ragged last tile (correctness of masking +
    # pipeline; real deployments should use the large default block_rows).
    B2 = 200
    x2 = jax.random.normal(kx2, (B2, M), jnp.float32)
    out2 = encode(x2, params, block_rows=128)
    jax.block_until_ready(out2)
    ref2 = reference_forward(x2, params)
    assert out2.shape == (B2, OUT)
    assert jnp.allclose(out2, ref2, atol=1e-3, rtol=1e-3), (
        float(jnp.max(jnp.abs(out2 - ref2))))

    print("KERNEL_OK")
</pallas_src>

<mosaic_0001>
module attributes {stable_mosaic.version = 11 : i64} {
  func.func @_scale_kernel(%arg0: i32, %arg1: memref<1xf32, #tpu.memory_space<smem>>, %arg2: memref<8x8xf32, #tpu.memory_space<vmem>>, %arg3: memref<8x8xf32, #tpu.memory_space<vmem>>) attributes {dimension_semantics = [#tpu.dimension_semantics<parallel>], iteration_bounds = array<i64: 1>, scalar_prefetch = 0 : i64, scratch_operands = 0 : i64, tpu.core_type = #tpu.core_type<tc>, window_params = [{transform_indices = @transform_0, window_bounds = array<i64: 1>}, {transform_indices = @transform_1, window_bounds = array<i64: 8, 8>}, {transform_indices = @transform_2, window_bounds = array<i64: 8, 8>}]} {
    %c0 = arith.constant 0 : index
    %c0_0 = arith.constant 0 : index
    %0 = vector.load %arg2[%c0, %c0_0] : memref<8x8xf32, #tpu.memory_space<vmem>>, vector<8x8xf32>
    %c0_1 = arith.constant 0 : index
    %1 = memref.load %arg1[%c0_1] : memref<1xf32, #tpu.memory_space<smem>>
    %2 = vector.broadcast %1 : f32 to vector<8x8xf32>
    %3 = arith.mulf %0, %2 : vector<8x8xf32>
    %c0_2 = arith.constant 0 : index
    %c0_3 = arith.constant 0 : index
    %4 = vector.load %arg3[%c0_2, %c0_3] : memref<8x8xf32, #tpu.memory_space<vmem>>, vector<8x8xf32>
    tpu.vector_store %arg3[%c0_2, %c0_3], %3 {strides = array<i32>} : memref<8x8xf32, #tpu.memory_space<vmem>>, vector<8x8xf32>,
    return
  }
  func.func @transform_0(%arg0: i32) -> i32 {
    %c0_i32 = arith.constant 0 : i32
    %c0_i32_0 = arith.constant 0 : i32
    return %c0_i32 : i32
  }
  func.func @transform_1(%arg0: i32) -> (i32, i32) {
    %c0_i32 = arith.constant 0 : i32
    %c0_i32_0 = arith.constant 0 : i32
    return %c0_i32, %arg0 : i32, i32
  }
  func.func @transform_2(%arg0: i32) -> (i32, i32) {
    %c0_i32 = arith.constant 0 : i32
    %c0_i32_0 = arith.constant 0 : i32
    return %c0_i32, %arg0 : i32, i32
  }
}

module attributes {stable_mosaic.version = 11 : i64} {
  func.func @_fwd_ssq_kernel(%arg0: i32, %arg1: memref<16x8xbf16, #tpu.memory_space<vmem>>, %arg2: memref<64x16xbf16, #tpu.memory_space<vmem>>, %arg3: memref<64x1xf32, #tpu.memory_space<vmem>>, %arg4: memref<64x64xbf16, #tpu.memory_space<vmem>>, %arg5: memref<64x1xf32, #tpu.memory_space<vmem>>, %arg6: memref<8x64xbf16, #tpu.memory_space<vmem>>, %arg7: memref<8x1xf32, #tpu.memory_space<vmem>>, %arg8: memref<8x8xf32, #tpu.memory_space<vmem>>, %arg9: memref<1x1x1xf32, #tpu.memory_space<vmem>>) attributes {dimension_semantics = [#tpu.dimension_semantics<parallel>], iteration_bounds = array<i64: 1>, scalar_prefetch = 0 : i64, scratch_operands = 0 : i64, tpu.core_type = #tpu.core_type<tc>, window_params = [{transform_indices = @transform_0, window_bounds = array<i64: 16, 8>}, {pipeline_mode = #tpu.pipeline_mode<synchronous>, transform_indices = @transform_1, window_bounds = array<i64: 64, 16>}, {pipeline_mode = #tpu.pipeline_mode<synchronous>, transform_indices = @transform_2, window_bounds = array<i64: 64, 1>}, {pipeline_mode = #tpu.pipeline_mode<synchronous>, transform_indices = @transform_3, window_bounds = array<i64: 64, 64>}, {pipeline_mode = #tpu.pipeline_mode<synchronous>, transform_indices = @transform_4, window_bounds = array<i64: 64, 1>}, {pipeline_mode = #tpu.pipeline_mode<synchronous>, transform_indices = @transform_5, window_bounds = array<i64: 8, 64>}, {pipeline_mode = #tpu.pipeline_mode<synchronous>, transform_indices = @transform_6, window_bounds = array<i64: 8, 1>}, {transform_indices = @transform_7, window_bounds = array<i64: 8, 8>}, {transform_indices = @transform_8, window_bounds = array<i64: 1, 1, 1>}]} {
    %c0 = arith.constant 0 : index
    %c0_0 = arith.constant 0 : index
    %0 = vector.load %arg1[%c0, %c0_0] : memref<16x8xbf16, #tpu.memory_space<vmem>>, vector<16x8xbf16>
    %c0_1 = arith.constant 0 : index
    %c0_2 = arith.constant 0 : index
    %1 = vector.load %arg2[%c0_1, %c0_2] : memref<64x16xbf16, #tpu.memory_space<vmem>>, vector<64x16xbf16>
    %cst = arith.constant dense<0.000000e+00> : vector<64x8xf32>
    %2 = tpu.matmul %1, %0, %cst {dimension_numbers = #tpu.dot_dimension_numbers<[1], [0], [0], [1], [0, 0, 1, 1], [], []>} : vector<64x16xbf16>, vector<16x8xbf16>, vector<64x8xf32> -> vector<64x8xf32>
    %c0_3 = arith.constant 0 : index
    %c0_4 = arith.constant 0 : index
    %3 = vector.load %arg3[%c0_3, %c0_4] : memref<64x1xf32, #tpu.memory_space<vmem>>, vector<64x1xf32>
    %4 = vector.broadcast %3 : vector<64x1xf32> to vector<64x8xf32>
    %5 = arith.addf %2, %4 : vector<64x8xf32>
    %cst_5 = arith.constant 0.000000e+00 : f32
    %6 = vector.broadcast %cst_5 : f32 to vector<64x8xf32>
    %7 = arith.maximumf %5, %6 : vector<64x8xf32>
    %c0_6 = arith.constant 0 : index
    %c0_7 = arith.constant 0 : index
    %8 = vector.load %arg4[%c0_6, %c0_7] : memref<64x64xbf16, #tpu.memory_space<vmem>>, vector<64x64xbf16>
    %9 = arith.truncf %7 : vector<64x8xf32> to vector<64x8xbf16>
    %cst_8 = arith.constant dense<0.000000e+00> : vector<64x8xf32>
    %10 = tpu.matmul %8, %9, %cst_8 {dimension_numbers = #tpu.dot_dimension_numbers<[1], [0], [0], [1], [0, 0, 1, 1], [], []>} : vector<64x64xbf16>, vector<64x8xbf16>, vector<64x8xf32> -> vector<64x8xf32>
    %c0_9 = arith.constant 0 : index
    %c0_10 = arith.constant 0 : index
    %11 = vector.load %arg5[%c0_9, %c0_10] : memref<64x1xf32, #tpu.memory_space<vmem>>, vector<64x1xf32>
    %12 = vector.broadcast %11 : vector<64x1xf32> to vector<64x8xf32>
    %13 = arith.addf %10, %12 : vector<64x8xf32>
    %cst_11 = arith.constant 0.000000e+00 : f32
    %14 = vector.broadcast %cst_11 : f32 to vector<64x8xf32>
    %15 = arith.maximumf %13, %14 : vector<64x8xf32>
    %c0_12 = arith.constant 0 : index
    %c0_13 = arith.constant 0 : index
    %16 = vector.load %arg6[%c0_12, %c0_13] : memref<8x64xbf16, #tpu.memory_space<vmem>>, vector<8x64xbf16>
    %17 = arith.truncf %15 : vector<64x8xf32> to vector<64x8xbf16>
    %cst_14 = arith.constant dense<0.000000e+00> : vector<8x8xf32>
    %18 = tpu.matmul %16, %17, %cst_14 {dimension_numbers = #tpu.dot_dimension_numbers<[1], [0], [0], [1], [0, 0, 1, 1], [], []>} : vector<8x64xbf16>, vector<64x8xbf16>, vector<8x8xf32> -> vector<8x8xf32>
    %c0_15 = arith.constant 0 : index
    %c0_16 = arith.constant 0 : index
    %19 = vector.load %arg7[%c0_15, %c0_16] : memref<8x1xf32, #tpu.memory_space<vmem>>, vector<8x1xf32>
    %20 = vector.broadcast %19 : vector<8x1xf32> to vector<8x8xf32>
    %21 = arith.addf %18, %20 : vector<8x8xf32>
    %c0_17 = arith.constant 0 : index
    %c0_18 = arith.constant 0 : index
    %22 = vector.load %arg8[%c0_17, %c0_18] : memref<8x8xf32, #tpu.memory_space<vmem>>, vector<8x8xf32>
    tpu.vector_store %arg8[%c0_17, %c0_18], %21 {strides = array<i32>} : memref<8x8xf32, #tpu.memory_space<vmem>>, vector<8x8xf32>,
    %c8_i32 = arith.constant 8 : i32
    %23 = arith.muli %arg0, %c8_i32 : i32
    %24 = tpu.iota {dimensions = array<i32: 1>} : vector<8x8xi32>
    %25 = vector.broadcast %23 : i32 to vector<8x8xi32>
    %26 = arith.addi %25, %24 : vector<8x8xi32>
    %c8_i32_19 = arith.constant 8 : i32
    %27 = vector.broadcast %c8_i32_19 : i32 to vector<8x8xi32>
    %28 = arith.cmpi slt, %26, %27 : vector<8x8xi32>
    %29 = arith.mulf %21, %21 : vector<8x8xf32>
    %cst_20 = arith.constant 0.000000e+00 : f32
    %30 = vector.broadcast %cst_20 : f32 to vector<8x8xf32>
    %31 = arith.select %28, %29, %30 : vector<8x8xi1>, vector<8x8xf32>
    %32 = vector.shape_cast %31 : vector<8x8xf32> to vector<1x8x8xf32>
    %cst_21 = arith.constant dense<0.000000e+00> : vector<1xf32>
    %33 = vector.multi_reduction <add>, %32, %cst_21 [1, 2] : vector<1x8x8xf32> to vector<1xf32>
    %34 = vector.shape_cast %33 : vector<1xf32> to vector<1x1x1xf32>
    %35 = vector.extract %34[0, 0, 0] : f32 from vector<1x1x1xf32>
    %36 = vector.broadcast %35 : f32 to vector<1x1xf32>
    %c0_22 = arith.constant 0 : index
    %c0_23 = arith.constant 0 : index
    %c0_24 = arith.constant 0 : index
    %37 = vector.load %arg9[%c0_22, %c0_23, %c0_24] : memref<1x1x1xf32, #tpu.memory_space<vmem>>, vector<1x1x1xf32>
    %38 = vector.shape_cast %37 : vector<1x1x1xf32> to vector<1x1xf32>
    %39 = vector.shape_cast %36 : vector<1x1xf32> to vector<1x1x1xf32>
    tpu.vector_store %arg9[%c0_22, %c0_23, %c0_24], %39 {strides = array<i32>} : memref<1x1x1xf32, #tpu.memory_space<vmem>>, vector<1x1x1xf32>,
    return
  }
  func.func @transform_0(%arg0: i32) -> (i32, i32) {
    %c0_i32 = arith.constant 0 : i32
    %c0_i32_0 = arith.constant 0 : i32
    return %c0_i32, %arg0 : i32, i32
  }
  func.func @transform_1(%arg0: i32) -> (i32, i32) {
    %c0_i32 = arith.constant 0 : i32
    %c0_i32_0 = arith.constant 0 : i32
    %c0_i32_1 = arith.constant 0 : i32
    return %c0_i32, %c0_i32_0 : i32, i32
  }
  func.func @transform_2(%arg0: i32) -> (i32, i32) {
    %c0_i32 = arith.constant 0 : i32
    %c0_i32_0 = arith.constant 0 : i32
    %c0_i32_1 = arith.constant 0 : i32
    return %c0_i32, %c0_i32_0 : i32, i32
  }
  func.func @transform_3(%arg0: i32) -> (i32, i32) {
    %c0_i32 = arith.constant 0 : i32
    %c0_i32_0 = arith.constant 0 : i32
    %c0_i32_1 = arith.constant 0 : i32
    return %c0_i32, %c0_i32_0 : i32, i32
  }
  func.func @transform_4(%arg0: i32) -> (i32, i32) {
    %c0_i32 = arith.constant 0 : i32
    %c0_i32_0 = arith.constant 0 : i32
    %c0_i32_1 = arith.constant 0 : i32
    return %c0_i32, %c0_i32_0 : i32, i32
  }
  func.func @transform_5(%arg0: i32) -> (i32, i32) {
    %c0_i32 = arith.constant 0 : i32
    %c0_i32_0 = arith.constant 0 : i32
    %c0_i32_1 = arith.constant 0 : i32
    return %c0_i32, %c0_i32_0 : i32, i32
  }
  func.func @transform_6(%arg0: i32) -> (i32, i32) {
    %c0_i32 = arith.constant 0 : i32
    %c0_i32_0 = arith.constant 0 : i32
    %c0_i32_1 = arith.constant 0 : i32
    return %c0_i32, %c0_i32_0 : i32, i32
  }
  func.func @transform_7(%arg0: i32) -> (i32, i32) {
    %c0_i32 = arith.constant 0 : i32
    %c0_i32_0 = arith.constant 0 : i32
    return %c0_i32, %arg0 : i32, i32
  }
  func.func @transform_8(%arg0: i32) -> (i32, i32, i32) {
    %c0_i32 = arith.constant 0 : i32
    %c0_i32_0 = arith.constant 0 : i32
    %c0_i32_1 = arith.constant 0 : i32
    return %arg0, %c0_i32, %c0_i32_0 : i32, i32, i32
  }
}

</mosaic_0001>

<llo_original>
// kernel: encoder_forward.3
$region0: #{encoder_forward.3}
  #allocation0 [shape = 'u32[]', space=smem, size = 0x4, offset = 0x4, fixed_abs, tag = 'smem constant byte address 0x4 - core index']
  #allocation1 [shape = 'u32[144,128]{1,0:T(1,128)}', space=vmem, size = 0x12000, scoped, tag = 'internal scratch']
  #allocation2 [shape = 'f32[1]{0:T(128)S(6)}', space=smem, size = 0x200, scoped, tag = 'scoped memory for encoder_forward.3']
  %s0 = inlined_call_operand.<no memory space> [shape: f32[1], index: 0, kind: input, shape index: {}]
  %s1 = inlined_call_operand.vmem [shape: f32[8,8], index: 1, kind: input, shape index: {}]
  %s2 = inlined_call_operand.vmem [shape: f32[8,8], index: 2, kind: output, shape index: {}]
  %s3 = sld [smem:[#allocation0]]
  $region18: #{encoder_forward.3} parent=0
    _
  %s5 = ssub.s32 1, %s3
  %s6 = scalar_select 0, %s5, %s3
  %7 = sst [smem:[#allocation2]] %s0
  // Predicated region
  $region2: #{encoder_forward.3} parent=0 // pred_check
    _
  $region3: #{encoder_forward.3} parent=0 // pred_check_branch
    %9 = sbr.rel (0) target = $region5
  $region4: #{encoder_forward.3} parent=0 // pred_region
    _
  $region5: #{encoder_forward.3} parent=0 // pred_fallthru
    _
  // Predicated region
  $region6: #{encoder_forward.3} parent=0 // pred_check
    _
  $region7: #{encoder_forward.3} parent=0 // pred_check_branch
    %11 = sbr.rel (0) target = $region9
  $region8: #{encoder_forward.3} parent=0 // pred_region
    _
  $region9: #{encoder_forward.3} parent=0 // pred_fallthru
    _
  %v12 = vld [vmem:[%s1] sm:$0xff]
  %s13 = sld [smem:[#allocation2]]
  %v14 = vstv %s13
  %v15 = vmul.f32 %v12, %v14
  %vm16 = vcmask 64512
  %17 = vst.msk [vmem:[%s2] sm:$0xff] %vm16, %v15
  // Predicated region
  $region10: #{encoder_forward.3} parent=0 // pred_check
    _
  $region11: #{encoder_forward.3} parent=0 // pred_check_branch
    %19 = sbr.rel (0) target = $region13
  $region12: #{encoder_forward.3} parent=0 // pred_region
    _
  $region13: #{encoder_forward.3} parent=0 // pred_fallthru
    _
  // Predicated region
  $region14: #{encoder_forward.3} parent=0 // pred_check
    _
  $region15: #{encoder_forward.3} parent=0 // pred_check_branch
    %21 = sbr.rel (0) target = $region17
  $region16: #{encoder_forward.3} parent=0 // pred_region
    _
  $region17: #{encoder_forward.3} parent=0 // pred_fallthru
    _

// kernel: encoder_forward.2
$region0: #{encoder_forward.2}
  #allocation0 [shape = 'u32[]', space=smem, size = 0x4, offset = 0x4, fixed_abs, tag = 'smem constant byte address 0x4 - core index']
  #allocation1 [shape = 'u32[144,128]{1,0:T(1,128)}', space=vmem, size = 0x12000, scoped, tag = 'internal scratch']
  %s0 = inlined_call_operand.vmem [shape: bf16[16,8], index: 0, kind: input, shape index: {}]
  %s1 = inlined_call_operand.vmem [shape: bf16[64,16], index: 1, kind: input, shape index: {}]
  %s2 = inlined_call_operand.vmem [shape: f32[64,1], index: 2, kind: input, shape index: {}]
  %s3 = inlined_call_operand.vmem [shape: bf16[64,64], index: 3, kind: input, shape index: {}]
  %s4 = inlined_call_operand.vmem [shape: f32[64,1], index: 4, kind: input, shape index: {}]
  %s5 = inlined_call_operand.vmem [shape: bf16[8,64], index: 5, kind: input, shape index: {}]
  %s6 = inlined_call_operand.vmem [shape: f32[8,1], index: 6, kind: input, shape index: {}]
  %s7 = inlined_call_operand.vmem [shape: f32[8,8], index: 7, kind: output, shape index: {0}]
  %s8 = inlined_call_operand.hbm [shape: f32[1,1,1], index: 8, kind: output, shape index: {1}]
  %9 = xla_tuple %s7, %s8
  %s10 = sld [smem:[#allocation0]]
  $region46: #{encoder_forward.2} parent=0
    _
  %s12 = ssub.s32 1, %s10
  %s13 = scalar_select 0, %s12, %s10
  $region1: #{encoder_forward.2} parent=0
    #allocation2 [shape = 'u8[512]{0}', space=vmem, size = 0x400, scoped, tag = 'output window, operand 1, single buffered']
    #allocation3 [shape = 's32[1]{0}', space=sflag, size = 0x4, scoped, tag = 'scoped memory for encoder_forward.2']
    %14 = vsyncpa [#allocation3], 0
    // Predicated region
    $region2: #{encoder_forward.2} parent=1 // pred_check
      _
    $region3: #{encoder_forward.2} parent=1 // pred_check_branch
      %16 = sbr.rel (0) target = $region5
    $region4: #{encoder_forward.2} parent=1 // pred_region
      _
    $region5: #{encoder_forward.2} parent=1 // pred_fallthru
      _
    // Predicated region
    $region6: #{encoder_forward.2} parent=1 // pred_check
      _
    $region7: #{encoder_forward.2} parent=1 // pred_check_branch
      %18 = sbr.rel (0) target = $region9
    $region8: #{encoder_forward.2} parent=1 // pred_region
      _
    $region9: #{encoder_forward.2} parent=1 // pred_fallthru
      _
    // Predicated region
    $region10: #{encoder_forward.2} parent=1 // pred_check
      _
    $region11: #{encoder_forward.2} parent=1 // pred_check_branch
      %20 = sbr.rel (0) target = $region13
    $region12: #{encoder_forward.2} parent=1 // pred_region
      _
    $region13: #{encoder_forward.2} parent=1 // pred_fallthru
      _
    // Predicated region
    $region14: #{encoder_forward.2} parent=1 // pred_check
      _
    $region15: #{encoder_forward.2} parent=1 // pred_check_branch
      %22 = sbr.rel (0) target = $region17
    $region16: #{encoder_forward.2} parent=1 // pred_region
      _
    $region17: #{encoder_forward.2} parent=1 // pred_fallthru
      _
    // Predicated region
    $region18: #{encoder_forward.2} parent=1 // pred_check
      _
    $region19: #{encoder_forward.2} parent=1 // pred_check_branch
      %24 = sbr.rel (0) target = $region21
    $region20: #{encoder_forward.2} parent=1 // pred_region
      _
    $region21: #{encoder_forward.2} parent=1 // pred_fallthru
      _
    // Predicated region
    $region22: #{encoder_forward.2} parent=1 // pred_check
      _
    $region23: #{encoder_forward.2} parent=1 // pred_check_branch
      %26 = sbr.rel (0) target = $region25
    $region24: #{encoder_forward.2} parent=1 // pred_region
      _
    $region25: #{encoder_forward.2} parent=1 // pred_fallthru
      _
    // Predicated region
    $region26: #{encoder_forward.2} parent=1 // pred_check
      _
    $region27: #{encoder_forward.2} parent=1 // pred_check_branch
      %28 = sbr.rel (0) target = $region29
    $region28: #{encoder_forward.2} parent=1 // pred_region
      _
    $region29: #{encoder_forward.2} parent=1 // pred_fallthru
      _
    %v30 = vld [vmem:[%s0] sm:$0xf]
    %v31 = vld [vmem:[%s0 + $0x4] sm:$0xf]
    %v32 = vld [vmem:[%s1] sm:$0xf]
    %v33 = vld [vmem:[%s1 + $0x4] sm:$0xf]
    %v34 = vld [vmem:[%s1 + $0x8] sm:$0xf]
    %v35 = vld [vmem:[%s1 + $0xc] sm:$0xf]
    %v36 = vld [vmem:[%s1 + $0x10] sm:$0xf]
    %v37 = vld [vmem:[%s1 + $0x14] sm:$0xf]
    %v38 = vld [vmem:[%s1 + $0x18] sm:$0xf]
    %v39 = vld [vmem:[%s1 + $0x1c] sm:$0xf]
    %v40 = vld [vmem:[%s2] sm:$0xff]
    %v41 = vld [vmem:[%s2 + $0x8] sm:$0xff]
    %v42 = vld [vmem:[%s2 + $0x10] sm:$0xff]
    %v43 = vld [vmem:[%s2 + $0x18] sm:$0xff]
    %v44 = vld [vmem:[%s2 + $0x20] sm:$0xff]
    %v45 = vld [vmem:[%s2 + $0x28] sm:$0xff]
    %v46 = vld [vmem:[%s2 + $0x30] sm:$0xff]
    %v47 = vld [vmem:[%s2 + $0x38] sm:$0xff]
    %49 = vset.pattern.permute.xlu0 0
    %50 = vperm.xlu0 %49, %v40
    %v51 = vpop.permute.xlu0 %50
    %54 = vset.pattern.permute.xlu0 0
    %55 = vperm.xlu0 %54, %v41
    %v56 = vpop.permute.xlu0 %55
    %59 = vset.pattern.permute.xlu0 0
    %60 = vperm.xlu0 %59, %v42
    %v61 = vpop.permute.xlu0 %60
    %64 = vset.pattern.permute.xlu0 0
    %65 = vperm.xlu0 %64, %v43
    %v66 = vpop.permute.xlu0 %65
    %69 = vset.pattern.permute.xlu0 0
    %70 = vperm.xlu0 %69, %v44
    %v71 = vpop.permute.xlu0 %70
    %74 = vset.pattern.permute.xlu0 0
    %75 = vperm.xlu0 %74, %v45
    %v76 = vpop.permute.xlu0 %75
    %79 = vset.pattern.permute.xlu0 0
    %80 = vperm.xlu0 %79, %v46
    %v81 = vpop.permute.xlu0 %80
    %84 = vset.pattern.permute.xlu0 0
    %85 = vperm.xlu0 %84, %v47
    %v86 = vpop.permute.xlu0 %85
    %v96 = vunpack.c.l.b16 %v32
    %v97 = vunpack.c.l.b16 %v33
    %v98 = vunpack.c.l.b16 %v34
    %v99 = vunpack.c.l.b16 %v35
    %v100 = vunpack.c.l.b16 %v36
    %v101 = vunpack.c.l.b16 %v37
    %v102 = vunpack.c.l.b16 %v38
    %v103 = vunpack.c.l.b16 %v39
    %v104 = vpack.c.b16 %v97, %v96
    %v105 = vpack.c.b16 %v99, %v98
    %v106 = vpack.c.b16 %v101, %v100
    %v107 = vpack.c.b16 %v103, %v102
    %v110 = vunpack.c.l.b16 %v30
    %v111 = vunpack.c.l.b16 %v31
    %v112 = vpack.c.b16 %v111, %v110
    %vm114 = vcmask 130048
    %v116 = vsel %vm114, %v104, 0
    %v119 = vsel %vm114, %v105, 0
    %v122 = vsel %vm114, %v106, 0
    %v125 = vsel %vm114, %v107, 0
    %127 = vmatprep.subr.bf16.mxu0 0
    %128 = vmatpush1.bf16.msra.mxu0 %v112
    %129 = vmatprep.subr.bf16.mxu0 0
    %130 = vmatpush1.bf16.msra.mxu0 0
    %131 = vmatprep.subr.bf16.mxu0 0
    %132 = vmatpush1.bf16.msra.mxu0 0
    %133 = vmatprep.subr.bf16.mxu0 0
    %134 = vmatpush1.bf16.msra.mxu0 0
    %135 = vmatprep.subr.bf16.mxu0 0
    %136 = vmatpush1.bf16.msra.mxu0 0
    %137 = vmatprep.subr.bf16.mxu0 0
    %138 = vmatpush1.bf16.msra.mxu0 0
    %139 = vmatprep.subr.bf16.mxu0 0
    %140 = vmatpush1.bf16.msra.mxu0 0
    %141 = vmatprep.subr.bf16.mxu0 0
    %142 = vmatpush1.bf16.msra.mxu0 0
    %143 = vmatprep.subr.bf16.mxu0 0
    %144 = vmatpush1.bf16.msra.mxu0 0
    %145 = vmatprep.subr.bf16.mxu0 0
    %146 = vmatpush1.bf16.msra.mxu0 0
    %147 = vmatprep.subr.bf16.mxu0 0
    %148 = vmatpush1.bf16.msra.mxu0 0
    %149 = vmatprep.subr.bf16.mxu0 0
    %150 = vmatpush1.bf16.msra.mxu0 0
    %151 = vmatprep.subr.bf16.mxu0 0
    %152 = vmatpush1.bf16.msra.mxu0 0
    %153 = vmatprep.subr.bf16.mxu0 0
    %154 = vmatpush1.bf16.msra.mxu0 0
    %155 = vmatprep.subr.bf16.mxu0 0
    %156 = vmatpush1.bf16.msra.mxu0 0
    %157 = vmatprep.subr.bf16.mxu0 0
    %158 = vmatpush1.bf16.msra.mxu0 0
    %159 = vmatprep.mubr.bf16.mxu0 0
    %160 = vmatmul.mubr.bf16.gmra.mrb[0].mxu0 %v116
    %v161 = vpop.f32.mrb[0].mxu0
    %v162 = vadd.f32 %v51, %v161
    %v163 = vpop.f32.mrb[0].mxu0
    %v164 = vpop.f32.mrb[0].mxu0
    %v165 = vadd.f32 %v56, %v164
    %v166 = vpop.f32.mrb[0].mxu0
    %167 = vmatprep.mubr.bf16.mxu0 0
    %168 = vmatmul.mubr.bf16.gmra.mrb[0].mxu0 %v119
    %v169 = vpop.f32.mrb[0].mxu0
    %v170 = vadd.f32 %v61, %v169
    %v171 = vpop.f32.mrb[0].mxu0
    %v172 = vpop.f32.mrb[0].mxu0
    %v173 = vadd.f32 %v66, %v172
    %v174 = vpop.f32.mrb[0].mxu0
    %175 = vmatprep.mubr.bf16.mxu0 0
    %176 = vmatmul.mubr.bf16.gmra.mrb[0].mxu0 %v122
    %v177 = vpop.f32.mrb[0].mxu0
    %v178 = vadd.f32 %v71, %v177
    %v179 = vpop.f32.mrb[0].mxu0
    %v180 = vpop.f32.mrb[0].mxu0
    %v181 = vadd.f32 %v76, %v180
    %v182 = vpop.f32.mrb[0].mxu0
    %183 = vmatprep.mubr.bf16.mxu0 0
    %184 = vmatmul.mubr.bf16.gmra.mrb[0].mxu0 %v125
    %v185 = vpop.f32.mrb[0].mxu0
    %v186 = vadd.f32 %v81, %v185
    %v187 = vpop.f32.mrb[0].mxu0
    %v188 = vpop.f32.mrb[0].mxu0
    %v189 = vadd.f32 %v86, %v188
    %v190 = vpop.f32.mrb[0].mxu0
    %191 = vdwg.mxu0
    %v192 = vmax.f32 %v162, 0.0
    %v193 = vmax.f32 %v165, 0.0
    %v194 = vmax.f32 %v170, 0.0
    %v195 = vmax.f32 %v173, 0.0
    %v196 = vmax.f32 %v178, 0.0
    %v197 = vmax.f32 %v181, 0.0
    %v198 = vmax.f32 %v186, 0.0
    %v199 = vmax.f32 %v189, 0.0
    %v200 = vld [vmem:[%s3] sm:$0xf]
    %v201 = vld [vmem:[%s3 + $0x4] sm:$0xf]
    %v202 = vld [vmem:[%s3 + $0x8] sm:$0xf]
    %v203 = vld [vmem:[%s3 + $0xc] sm:$0xf]
    %v204 = vld [vmem:[%s3 + $0x10] sm:$0xf]
    %v205 = vld [vmem:[%s3 + $0x14] sm:$0xf]
    %v206 = vld [vmem:[%s3 + $0x18] sm:$0xf]
    %v207 = vld [vmem:[%s3 + $0x1c] sm:$0xf]
    %v208 = vpack.c.bf16 %v193, %v192
    %v209 = vpack.c.bf16 %v195, %v194
    %v210 = vpack.c.bf16 %v197, %v196
    %v211 = vpack.c.bf16 %v199, %v198
    %v212 = vld [vmem:[%s4] sm:$0xff]
    %v213 = vld [vmem:[%s4 + $0x8] sm:$0xff]
    %v214 = vld [vmem:[%s4 + $0x10] sm:$0xff]
    %v215 = vld [vmem:[%s4 + $0x18] sm:$0xff]
    %v216 = vld [vmem:[%s4 + $0x20] sm:$0xff]
    %v217 = vld [vmem:[%s4 + $0x28] sm:$0xff]
    %v218 = vld [vmem:[%s4 + $0x30] sm:$0xff]
    %v219 = vld [vmem:[%s4 + $0x38] sm:$0xff]
    %221 = vset.pattern.permute.xlu0 0
    %222 = vperm.xlu0 %221, %v212
    %v223 = vpop.permute.xlu0 %222
    %226 = vset.pattern.permute.xlu0 0
    %227 = vperm.xlu0 %226, %v213
    %v228 = vpop.permute.xlu0 %227
    %231 = vset.pattern.permute.xlu0 0
    %232 = vperm.xlu0 %231, %v214
    %v233 = vpop.permute.xlu0 %232
    %236 = vset.pattern.permute.xlu0 0
    %237 = vperm.xlu0 %236, %v215
    %v238 = vpop.permute.xlu0 %237
    %241 = vset.pattern.permute.xlu0 0
    %242 = vperm.xlu0 %241, %v216
    %v243 = vpop.permute.xlu0 %242
    %246 = vset.pattern.permute.xlu0 0
    %247 = vperm.xlu0 %246, %v217
    %v248 = vpop.permute.xlu0 %247
    %251 = vset.pattern.permute.xlu0 0
    %252 = vperm.xlu0 %251, %v218
    %v253 = vpop.permute.xlu0 %252
    %256 = vset.pattern.permute.xlu0 0
    %257 = vperm.xlu0 %256, %v219
    %v258 = vpop.permute.xlu0 %257
    %v268 = vunpack.c.l.b16 %v200
    %v269 = vunpack.c.l.b16 %v201
    %v270 = vunpack.c.l.b16 %v202
    %v271 = vunpack.c.l.b16 %v203
    %v272 = vunpack.c.l.b16 %v204
    %v273 = vunpack.c.l.b16 %v205
    %v274 = vunpack.c.l.b16 %v206
    %v275 = vunpack.c.l.b16 %v207
    %v276 = vpack.c.b16 %v269, %v268
    %v277 = vpack.c.b16 %v271, %v270
    %v278 = vpack.c.b16 %v273, %v272
    %v279 = vpack.c.b16 %v275, %v274
    %vm280 = vcmask 523264
    %v282 = vsel %vm280, %v276, 0
    %v285 = vsel %vm280, %v277, 0
    %v288 = vsel %vm280, %v278, 0
    %v291 = vsel %vm280, %v279, 0
    %293 = vmatprep.subr.bf16.mxu0 0
    %294 = vmatpush1.bf16.msra.mxu0 %v208
    %295 = vmatprep.subr.bf16.mxu0 0
    %296 = vmatpush1.bf16.msra.mxu0 %v209
    %297 = vmatprep.subr.bf16.mxu0 0
    %298 = vmatpush1.bf16.msra.mxu0 %v210
    %299 = vmatprep.subr.bf16.mxu0 0
    %300 = vmatpush1.bf16.msra.mxu0 %v211
    %301 = vmatprep.subr.bf16.mxu0 0
    %302 = vmatpush1.bf16.msra.mxu0 0
    %303 = vmatprep.subr.bf16.mxu0 0
    %304 = vmatpush1.bf16.msra.mxu0 0
    %305 = vmatprep.subr.bf16.mxu0 0
    %306 = vmatpush1.bf16.msra.mxu0 0
    %307 = vmatprep.subr.bf16.mxu0 0
    %308 = vmatpush1.bf16.msra.mxu0 0
    %309 = vmatprep.subr.bf16.mxu0 0
    %310 = vmatpush1.bf16.msra.mxu0 0
    %311 = vmatprep.subr.bf16.mxu0 0
    %312 = vmatpush1.bf16.msra.mxu0 0
    %313 = vmatprep.subr.bf16.mxu0 0
    %314 = vmatpush1.bf16.msra.mxu0 0
    %315 = vmatprep.subr.bf16.mxu0 0
    %316 = vmatpush1.bf16.msra.mxu0 0
    %317 = vmatprep.subr.bf16.mxu0 0
    %318 = vmatpush1.bf16.msra.mxu0 0
    %319 = vmatprep.subr.bf16.mxu0 0
    %320 = vmatpush1.bf16.msra.mxu0 0
    %321 = vmatprep.subr.bf16.mxu0 0
    %322 = vmatpush1.bf16.msra.mxu0 0
    %323 = vmatprep.subr.bf16.mxu0 0
    %324 = vmatpush1.bf16.msra.mxu0 0
    %325 = vmatprep.mubr.bf16.mxu0 0
    %326 = vmatmul.mubr.bf16.gmra.mrb[0].mxu0 %v282
    %v327 = vpop.f32.mrb[0].mxu0
    %v328 = vadd.f32 %v223, %v327
    %v329 = vpop.f32.mrb[0].mxu0
    %v330 = vpop.f32.mrb[0].mxu0
    %v331 = vadd.f32 %v228, %v330
    %v332 = vpop.f32.mrb[0].mxu0
    %333 = vmatprep.mubr.bf16.mxu0 0
    %334 = vmatmul.mubr.bf16.gmra.mrb[0].mxu0 %v285
    %v335 = vpop.f32.mrb[0].mxu0
    %v336 = vadd.f32 %v233, %v335
    %v337 = vpop.f32.mrb[0].mxu0
    %v338 = vpop.f32.mrb[0].mxu0
    %v339 = vadd.f32 %v238, %v338
    %v340 = vpop.f32.mrb[0].mxu0
    %341 = vmatprep.mubr.bf16.mxu0 0
    %342 = vmatmul.mubr.bf16.gmra.mrb[0].mxu0 %v288
    %v343 = vpop.f32.mrb[0].mxu0
    %v344 = vadd.f32 %v243, %v343
    %v345 = vpop.f32.mrb[0].mxu0
    %v346 = vpop.f32.mrb[0].mxu0
    %v347 = vadd.f32 %v248, %v346
    %v348 = vpop.f32.mrb[0].mxu0
    %349 = vmatprep.mubr.bf16.mxu0 0
    %350 = vmatmul.mubr.bf16.gmra.mrb[0].mxu0 %v291
    %v351 = vpop.f32.mrb[0].mxu0
    %v352 = vadd.f32 %v253, %v351
    %v353 = vpop.f32.mrb[0].mxu0
    %v354 = vpop.f32.mrb[0].mxu0
    %v355 = vadd.f32 %v258, %v354
    %v356 = vpop.f32.mrb[0].mxu0
    %357 = vdwg.mxu0
    %v358 = vmax.f32 %v328, 0.0
    %v359 = vmax.f32 %v331, 0.0
    %v360 = vmax.f32 %v336, 0.0
    %v361 = vmax.f32 %v339, 0.0
    %v362 = vmax.f32 %v344, 0.0
    %v363 = vmax.f32 %v347, 0.0
    %v364 = vmax.f32 %v352, 0.0
    %v365 = vmax.f32 %v355, 0.0
    %v366 = vld [vmem:[%s5] sm:$0xf]
    %v367 = vpack.c.bf16 %v359, %v358
    %v368 = vpack.c.bf16 %v361, %v360
    %v369 = vpack.c.bf16 %v363, %v362
    %v370 = vpack.c.bf16 %v365, %v364
    %v371 = vld [vmem:[%s6] sm:$0xff]
    %373 = vset.pattern.permute.xlu0 0
    %374 = vperm.xlu0 %373, %v371
    %v375 = vpop.permute.xlu0 %374
    %v378 = vsel %vm280, %v366, 0
    %380 = vmatprep.subr.bf16.mxu0 0
    %381 = vmatpush1.bf16.msra.mxu0 %v367
    %382 = vmatprep.subr.bf16.mxu0 0
    %383 = vmatpush1.bf16.msra.mxu0 %v368
    %384 = vmatprep.subr.bf16.mxu0 0
    %385 = vmatpush1.bf16.msra.mxu0 %v369
    %386 = vmatprep.subr.bf16.mxu0 0
    %387 = vmatpush1.bf16.msra.mxu0 %v370
    %388 = vmatprep.subr.bf16.mxu0 0
    %389 = vmatpush1.bf16.msra.mxu0 0
    %390 = vmatprep.subr.bf16.mxu0 0
    %391 = vmatpush1.bf16.msra.mxu0 0
    %392 = vmatprep.subr.bf16.mxu0 0
    %393 = vmatpush1.bf16.msra.mxu0 0
    %394 = vmatprep.subr.bf16.mxu0 0
    %395 = vmatpush1.bf16.msra.mxu0 0
    %396 = vmatprep.subr.bf16.mxu0 0
    %397 = vmatpush1.bf16.msra.mxu0 0
    %398 = vmatprep.subr.bf16.mxu0 0
    %399 = vmatpush1.bf16.msra.mxu0 0
    %400 = vmatprep.subr.bf16.mxu0 0
    %401 = vmatpush1.bf16.msra.mxu0 0
    %402 = vmatprep.subr.bf16.mxu0 0
    %403 = vmatpush1.bf16.msra.mxu0 0
    %404 = vmatprep.subr.bf16.mxu0 0
    %405 = vmatpush1.bf16.msra.mxu0 0
    %406 = vmatprep.subr.bf16.mxu0 0
    %407 = vmatpush1.bf16.msra.mxu0 0
    %408 = vmatprep.subr.bf16.mxu0 0
    %409 = vmatpush1.bf16.msra.mxu0 0
    %410 = vmatprep.subr.bf16.mxu0 0
    %411 = vmatpush1.bf16.msra.mxu0 0
    %412 = vmatprep.mubr.bf16.mxu0 0
    %413 = vmatmul.mubr.bf16.gmra.mrb[0].mxu0 %v378
    %v414 = vpop.f32.mrb[0].mxu0
    %v415 = vadd.f32 %v375, %v414
    %v416 = vpop.f32.mrb[0].mxu0
    %v417 = vpop.f32.mrb[0].mxu0
    %v418 = vpop.f32.mrb[0].mxu0
    %419 = vdwg.mxu0
    %vm420 = vcmask 64512
    %421 = vst.msk [vmem:[%s7] sm:$0xff] %vm420, %v415
    %s422 = smul.u32 0, 8
    %v423 = vlaneseq
    %v424 = vand.u32 %v423, 127
    %v425 = vstv %s422
    %v426 = vadd.s32 %v425, %v424
    %vm427 = vcmp.lt.s32.totalorder %v426, 8
    %v428 = vmul.f32 %v415, %v415
    %v429 = vsel %vm427, %v428, 0.0
    %v430 = vsel %vm420, %v429, 0.0
    %431 = vadd.xlane.f32.xlu0 %v430
    %v432 = vpop.xlane.xlu0 %431
    %v433 = vrot.slane %v432, 4
    %v434 = vadd.f32 %v432, %v433
    %v435 = vrot.slane %v434, 2
    %v436 = vadd.f32 %v434, %v435
    %v437 = vrot.slane %v436, 1
    %v438 = vadd.f32 %v436, %v437
    %s439 = vtos %v438
    %v440 = vstv %s439
    %vm441 = vcmask 0
    %442 = vst.msk [vmem:[#allocation2] sm:$0x1] %vm441, %v440
    // Predicated region
    $region30: #{encoder_forward.2} parent=1 // pred_check
      _
    $region31: #{encoder_forward.2} parent=1 // pred_check_branch
      %444 = sbr.rel (0) target = $region33
    $region32: #{encoder_forward.2} parent=1 // pred_region
      _
    $region33: #{encoder_forward.2} parent=1 // pred_fallthru
      _
    // Predicated region
    $region34: #{encoder_forward.2} parent=1 // pred_check
      _
    $region35: #{encoder_forward.2} parent=1 // pred_check_branch
      %446 = sbr.rel (0) target = $region37
    $region36: #{encoder_forward.2} parent=1 // pred_region
      %s448 = ssub.s32 16, 16
      %449 = vsyncadd [#allocation3], %s448
      %s451 = sshll.u32 [#allocation2], 4
      %s452 = int_to_ptr.vmem [resolvable:$true] %s451
      %454 = dma.vmem_to_hbm [thread:$0]  %s452, 16, %s8, [#allocation3]
    $region37: #{encoder_forward.2} parent=1 // pred_fallthru
      _
    // Predicated region
    $region38: #{encoder_forward.2} parent=1 // pred_check
      _
    $region39: #{encoder_forward.2} parent=1 // pred_check_branch
      %456 = sbr.rel (0) target = $region41
    $region40: #{encoder_forward.2} parent=1 // pred_region
      _
    $region41: #{encoder_forward.2} parent=1 // pred_fallthru
      _
    // Predicated region
    $region42: #{encoder_forward.2} parent=1 // pred_check
      _
    $region43: #{encoder_forward.2} parent=1 // pred_check_branch
      %458 = sbr.rel (0) target = $region45
    $region44: #{encoder_forward.2} parent=1 // pred_region
      %459 = dma.done [#allocation3], 16
    $region45: #{encoder_forward.2} parent=1 // pred_fallthru
      _
    %460 = vsyncpa [#allocation3], 1

</llo_original>
